<compile_context>
chip_gen: v5e
topology: v5e:2x2
jax: 0.10.0
libtpu: 0.0.40
codegen_flags: <defaults>
</compile_context>

<pallas_src>
import jax
import jax.numpy as jnp
from jax.experimental import pallas as pl
from jax.experimental.pallas import tpu as pltpu


def _linear_t_kernel(w_ref, b_ref, xT_ref, oT_ref):
    # w_ref : SMEM [out_f, in_f]     b_ref : SMEM [out_f]
    # xT_ref: VMEM [in_f, TB]        oT_ref: VMEM [out_f, TB]
    out_f, in_f = w_ref.shape
    acc = [None] * out_f
    for k in range(in_f):                      # unrolled: in_f is tiny & static
        xk = xT_ref[k:k + 1, :].astype(jnp.float32)   # [1, TB] lane-dense row
        for j in range(out_f):
            term = xk * w_ref[j, k]            # SMEM scalar * VPU vector
            acc[j] = term if acc[j] is None else acc[j] + term
    for j in range(out_f):
        oT_ref[j:j + 1, :] = (acc[j] + b_ref[j]).astype(oT_ref.dtype)


# Rows per grid step in the tiled path (multiple of 128).  Double-buffered
# working set at this size is ~8 MiB, well under the scoped-VMEM default on
# every generation (v5e 16 MiB / v6e 32 MiB / v7x 32 MiB).
_BATCH_TILE = 64 * 1024


@jax.jit
def linear_forward(x, w, b):
    """Pallas equivalent of Model.forward: nn.Linear(input_size, output_size)."""
    B, in_f = x.shape
    out_f, in_f2 = w.shape
    assert in_f == in_f2

    # Feature-major (lane-dense) view of the activations.  Ideally the
    # upstream op supplies x in this layout already and this transpose fuses
    # away; here it is a plain XLA op inside the same jit.
    xT = x.T  # [in_f, B]

    if B <= _BATCH_TILE:
        tb = B                      # single block == full array (any B legal)
        grid = (1,)
    else:
        tb = _BATCH_TILE            # 128-divisible lane tile; ragged tail is
        grid = (pl.cdiv(B, tb),)    # bounds-masked by Pallas on writeback.

    yT = pl.pallas_call(
        _linear_t_kernel,
        out_shape=jax.ShapeDtypeStruct((out_f, B), x.dtype),
        grid=grid,
        in_specs=[
            pl.BlockSpec(memory_space=pltpu.MemorySpace.SMEM),   # W  (scalars)
            pl.BlockSpec(memory_space=pltpu.MemorySpace.SMEM),   # b  (scalars)
            pl.BlockSpec((in_f, tb), lambda i: (0, i)),          # x^T tile
        ],
        out_specs=pl.BlockSpec((out_f, tb), lambda i: (0, i)),   # y^T tile
        compiler_params=pltpu.CompilerParams(
            dimension_semantics=("parallel",),        # megacore / v7x 2 TCs
            vmem_limit_bytes=32 * 1024 * 1024,        # headroom, safe on v7x
        ),
    )(w, b, xT)

    return yT.T  # back to PyTorch [B, out_f] layout


if __name__ == "__main__":
    input_size = 5
    output_size = 2
    batch = 8

    key = jax.random.PRNGKey(0)
    k_x, k_w, k_b = jax.random.split(key, 3)

    # Deterministic synthetic parameters (same shapes nn.Linear(5, 2) has).
    x = jax.random.normal(k_x, (batch, input_size), dtype=jnp.float32)
    w = jax.random.normal(k_w, (output_size, input_size), dtype=jnp.float32) * 0.1
    b = jax.random.normal(k_b, (output_size,), dtype=jnp.float32) * 0.1

    out = jax.block_until_ready(linear_forward(x, w, b))

    # The PyTorch module prints sizes inside forward(); do it host-side here.
    print("In Model: input size", x.shape, "output size: ", out.shape)

    # Sanity check against plain JAX reference.
    ref = x @ w.T + b
    assert out.shape == (batch, output_size)
    assert jnp.allclose(out, ref, atol=1e-5, rtol=1e-5), "mismatch vs reference"

    print("KERNEL_OK")
</pallas_src>

<mosaic_0001>
module attributes {stable_mosaic.version = 11 : i64} {
  func.func @_linear_t_kernel(%arg0: i32, %arg1: memref<2x5xf32, #tpu.memory_space<smem>>, %arg2: memref<2xf32, #tpu.memory_space<smem>>, %arg3: memref<5x8xf32, #tpu.memory_space<vmem>>, %arg4: memref<2x8xf32, #tpu.memory_space<vmem>>) attributes {dimension_semantics = [#tpu.dimension_semantics<parallel>], iteration_bounds = array<i64: 1>, scalar_prefetch = 0 : i64, scratch_operands = 0 : i64, tpu.core_type = #tpu.core_type<tc>, window_params = [{transform_indices = @transform_0, window_bounds = array<i64: 2, 5>}, {transform_indices = @transform_1, window_bounds = array<i64: 2>}, {transform_indices = @transform_2, window_bounds = array<i64: 5, 8>}, {transform_indices = @transform_3, window_bounds = array<i64: 2, 8>}]} {
    %c0 = arith.constant 0 : index
    %c0_0 = arith.constant 0 : index
    %0 = vector.load %arg3[%c0, %c0_0] : memref<5x8xf32, #tpu.memory_space<vmem>>, vector<1x8xf32>
    %c0_1 = arith.constant 0 : index
    %c0_2 = arith.constant 0 : index
    %1 = memref.load %arg1[%c0_1, %c0_2] : memref<2x5xf32, #tpu.memory_space<smem>>
    %2 = vector.broadcast %1 : f32 to vector<1x8xf32>
    %3 = arith.mulf %0, %2 : vector<1x8xf32>
    %c1 = arith.constant 1 : index
    %c0_3 = arith.constant 0 : index
    %4 = memref.load %arg1[%c1, %c0_3] : memref<2x5xf32, #tpu.memory_space<smem>>
    %5 = vector.broadcast %4 : f32 to vector<1x8xf32>
    %6 = arith.mulf %0, %5 : vector<1x8xf32>
    %c1_4 = arith.constant 1 : index
    %c0_5 = arith.constant 0 : index
    %7 = vector.load %arg3[%c1_4, %c0_5] : memref<5x8xf32, #tpu.memory_space<vmem>>, vector<1x8xf32>
    %c0_6 = arith.constant 0 : index
    %c1_7 = arith.constant 1 : index
    %8 = memref.load %arg1[%c0_6, %c1_7] : memref<2x5xf32, #tpu.memory_space<smem>>
    %9 = vector.broadcast %8 : f32 to vector<1x8xf32>
    %10 = arith.mulf %7, %9 : vector<1x8xf32>
    %11 = arith.addf %3, %10 : vector<1x8xf32>
    %c1_8 = arith.constant 1 : index
    %c1_9 = arith.constant 1 : index
    %12 = memref.load %arg1[%c1_8, %c1_9] : memref<2x5xf32, #tpu.memory_space<smem>>
    %13 = vector.broadcast %12 : f32 to vector<1x8xf32>
    %14 = arith.mulf %7, %13 : vector<1x8xf32>
    %15 = arith.addf %6, %14 : vector<1x8xf32>
    %c2 = arith.constant 2 : index
    %c0_10 = arith.constant 0 : index
    %16 = vector.load %arg3[%c2, %c0_10] : memref<5x8xf32, #tpu.memory_space<vmem>>, vector<1x8xf32>
    %c0_11 = arith.constant 0 : index
    %c2_12 = arith.constant 2 : index
    %17 = memref.load %arg1[%c0_11, %c2_12] : memref<2x5xf32, #tpu.memory_space<smem>>
    %18 = vector.broadcast %17 : f32 to vector<1x8xf32>
    %19 = arith.mulf %16, %18 : vector<1x8xf32>
    %20 = arith.addf %11, %19 : vector<1x8xf32>
    %c1_13 = arith.constant 1 : index
    %c2_14 = arith.constant 2 : index
    %21 = memref.load %arg1[%c1_13, %c2_14] : memref<2x5xf32, #tpu.memory_space<smem>>
    %22 = vector.broadcast %21 : f32 to vector<1x8xf32>
    %23 = arith.mulf %16, %22 : vector<1x8xf32>
    %24 = arith.addf %15, %23 : vector<1x8xf32>
    %c3 = arith.constant 3 : index
    %c0_15 = arith.constant 0 : index
    %25 = vector.load %arg3[%c3, %c0_15] : memref<5x8xf32, #tpu.memory_space<vmem>>, vector<1x8xf32>
    %c0_16 = arith.constant 0 : index
    %c3_17 = arith.constant 3 : index
    %26 = memref.load %arg1[%c0_16, %c3_17] : memref<2x5xf32, #tpu.memory_space<smem>>
    %27 = vector.broadcast %26 : f32 to vector<1x8xf32>
    %28 = arith.mulf %25, %27 : vector<1x8xf32>
    %29 = arith.addf %20, %28 : vector<1x8xf32>
    %c1_18 = arith.constant 1 : index
    %c3_19 = arith.constant 3 : index
    %30 = memref.load %arg1[%c1_18, %c3_19] : memref<2x5xf32, #tpu.memory_space<smem>>
    %31 = vector.broadcast %30 : f32 to vector<1x8xf32>
    %32 = arith.mulf %25, %31 : vector<1x8xf32>
    %33 = arith.addf %24, %32 : vector<1x8xf32>
    %c4 = arith.constant 4 : index
    %c0_20 = arith.constant 0 : index
    %34 = vector.load %arg3[%c4, %c0_20] : memref<5x8xf32, #tpu.memory_space<vmem>>, vector<1x8xf32>
    %c0_21 = arith.constant 0 : index
    %c4_22 = arith.constant 4 : index
    %35 = memref.load %arg1[%c0_21, %c4_22] : memref<2x5xf32, #tpu.memory_space<smem>>
    %36 = vector.broadcast %35 : f32 to vector<1x8xf32>
    %37 = arith.mulf %34, %36 : vector<1x8xf32>
    %38 = arith.addf %29, %37 : vector<1x8xf32>
    %c1_23 = arith.constant 1 : index
    %c4_24 = arith.constant 4 : index
    %39 = memref.load %arg1[%c1_23, %c4_24] : memref<2x5xf32, #tpu.memory_space<smem>>
    %40 = vector.broadcast %39 : f32 to vector<1x8xf32>
    %41 = arith.mulf %34, %40 : vector<1x8xf32>
    %42 = arith.addf %33, %41 : vector<1x8xf32>
    %c0_25 = arith.constant 0 : index
    %43 = memref.load %arg2[%c0_25] : memref<2xf32, #tpu.memory_space<smem>>
    %44 = vector.broadcast %43 : f32 to vector<1x8xf32>
    %45 = arith.addf %38, %44 : vector<1x8xf32>
    %c0_26 = arith.constant 0 : index
    %c0_27 = arith.constant 0 : index
    %46 = vector.load %arg4[%c0_26, %c0_27] : memref<2x8xf32, #tpu.memory_space<vmem>>, vector<1x8xf32>
    tpu.vector_store %arg4[%c0_26, %c0_27], %45 {strides = array<i32>} : memref<2x8xf32, #tpu.memory_space<vmem>>, vector<1x8xf32>,
    %c1_28 = arith.constant 1 : index
    %47 = memref.load %arg2[%c1_28] : memref<2xf32, #tpu.memory_space<smem>>
    %48 = vector.broadcast %47 : f32 to vector<1x8xf32>
    %49 = arith.addf %42, %48 : vector<1x8xf32>
    %c1_29 = arith.constant 1 : index
    %c0_30 = arith.constant 0 : index
    %50 = vector.load %arg4[%c1_29, %c0_30] : memref<2x8xf32, #tpu.memory_space<vmem>>, vector<1x8xf32>
    tpu.vector_store %arg4[%c1_29, %c0_30], %49 {strides = array<i32>} : memref<2x8xf32, #tpu.memory_space<vmem>>, vector<1x8xf32>,
    return
  }
  func.func @transform_0(%arg0: i32) -> (i32, i32) {
    %c0_i32 = arith.constant 0 : i32
    %c0_i32_0 = arith.constant 0 : i32
    %c0_i32_1 = arith.constant 0 : i32
    return %c0_i32, %c0_i32_0 : i32, i32
  }
  func.func @transform_1(%arg0: i32) -> i32 {
    %c0_i32 = arith.constant 0 : i32
    %c0_i32_0 = arith.constant 0 : i32
    return %c0_i32 : i32
  }
  func.func @transform_2(%arg0: i32) -> (i32, i32) {
    %c0_i32 = arith.constant 0 : i32
    %c0_i32_0 = arith.constant 0 : i32
    return %c0_i32, %arg0 : i32, i32
  }
  func.func @transform_3(%arg0: i32) -> (i32, i32) {
    %c0_i32 = arith.constant 0 : i32
    %c0_i32_0 = arith.constant 0 : i32
    return %c0_i32, %arg0 : i32, i32
  }
}

</mosaic_0001>

<llo_original>
// kernel: linear_forward.1
$region0: #{linear_forward.1}
  #allocation0 [shape = 'u32[]', space=smem, size = 0x4, offset = 0x4, fixed_abs, tag = 'smem constant byte address 0x4 - core index']
  #allocation1 [shape = 'u32[72,128]{1,0:T(1,128)}', space=vmem, size = 0x9000, scoped, tag = 'internal scratch']
  %s0 = inlined_call_operand.vmem [shape: f32[2,5], index: 0, kind: input, shape index: {}]
  %s1 = inlined_call_operand.vmem [shape: f32[2], index: 1, kind: input, shape index: {}]
  %s2 = inlined_call_operand.vmem [shape: f32[5,8], index: 2, kind: input, shape index: {}]
  %s3 = inlined_call_operand.hbm [shape: f32[2,8], index: 3, kind: output, shape index: {}]
  %s4 = sld [smem:[#allocation0]]
  $region30: #{linear_forward.1} parent=0
    _
  %s6 = ssub.s32 1, %s4
  %s7 = scalar_select 0, %s6, %s4
  $region1: #{linear_forward.1} parent=0
    #allocation2 [shape = 'u8[1024]{0}', space=smem, size = 0x400, scoped, tag = 'input window, operand 0, single buffered']
    #allocation3 [shape = 's32[1]{0}', space=sflag, size = 0x4, scoped, tag = 'scoped memory for linear_forward.1']
    #allocation4 [shape = 's32[1]{0}', space=sflag, size = 0x4, scoped, tag = 'scoped memory for linear_forward.1']
    #allocation5 [shape = 'u8[512]{0}', space=smem, size = 0x200, scoped, tag = 'input window, operand 1, single buffered']
    #allocation6 [shape = 's32[1]{0}', space=sflag, size = 0x4, scoped, tag = 'scoped memory for linear_forward.1']
    #allocation7 [shape = 'u8[1024]{0}', space=vmem, size = 0x400, scoped, tag = 'output window, operand 0, single buffered']
    %8 = vsyncpa [#allocation4], 0
    %9 = vsyncpa [#allocation6], 0
    %10 = vsyncpa [#allocation3], 0
    // Predicated region
    $region2: #{linear_forward.1} parent=1 // pred_check
      _
    $region3: #{linear_forward.1} parent=1 // pred_check_branch
      %12 = sbr.rel (0) target = $region5
    $region4: #{linear_forward.1} parent=1 // pred_region
      %14 = vsyncadd [#allocation4], 0
      %s16 = sshll.u32 %s0, 4
      %s17 = int_to_ptr.vmem [resolvable:$true] %s16
      %19 = dma.vmem_to_smem %s17, 32, [#allocation2], [#allocation4]
    $region5: #{linear_forward.1} parent=1 // pred_fallthru
      _
    // Predicated region
    $region6: #{linear_forward.1} parent=1 // pred_check
      _
    $region7: #{linear_forward.1} parent=1 // pred_check_branch
      %21 = sbr.rel (0) target = $region9
    $region8: #{linear_forward.1} parent=1 // pred_region
      %23 = vsyncadd [#allocation6], 0
      %s25 = sshll.u32 %s1, 4
      %s26 = int_to_ptr.vmem [resolvable:$true] %s25
      %28 = dma.vmem_to_smem %s26, 16, [#allocation5], [#allocation6]
    $region9: #{linear_forward.1} parent=1 // pred_fallthru
      _
    // Predicated region
    $region10: #{linear_forward.1} parent=1 // pred_check
      _
    $region11: #{linear_forward.1} parent=1 // pred_check_branch
      %30 = sbr.rel (0) target = $region13
    $region12: #{linear_forward.1} parent=1 // pred_region
      _
    $region13: #{linear_forward.1} parent=1 // pred_fallthru
      _
    // Predicated region
    $region14: #{linear_forward.1} parent=1 // pred_check
      _
    $region15: #{linear_forward.1} parent=1 // pred_check_branch
      %32 = sbr.rel (0) target = $region17
    $region16: #{linear_forward.1} parent=1 // pred_region
      %34 = dma.done [#allocation4], 32
    $region17: #{linear_forward.1} parent=1 // pred_fallthru
      _
    // Predicated region
    $region18: #{linear_forward.1} parent=1 // pred_check
      _
    $region19: #{linear_forward.1} parent=1 // pred_check_branch
      %36 = sbr.rel (0) target = $region21
    $region20: #{linear_forward.1} parent=1 // pred_region
      %38 = dma.done [#allocation6], 16
    $region21: #{linear_forward.1} parent=1 // pred_fallthru
      _
    %39 = sfence
    %v40 = vld [vmem:[%s2] sm:$0x1]
    %s41 = sld [smem:[#allocation2]]
    %v42 = vstv %s41
    %v43 = vmul.f32 %v40, %v42
    %s44 = sld [smem:[#allocation2 + $0x80]]
    %v45 = vstv %s44
    %v46 = vmul.f32 %v40, %v45
    %v47 = vld [vmem:[%s2 + $0x1] sm:$0x1]
    %s48 = sld [smem:[#allocation2 + $0x1]]
    %v49 = vstv %s48
    %v50 = vmul.f32 %v47, %v49
    %v51 = vadd.f32 %v43, %v50
    %s52 = sld [smem:[#allocation2 + $0x81]]
    %v53 = vstv %s52
    %v54 = vmul.f32 %v47, %v53
    %v55 = vadd.f32 %v46, %v54
    %v56 = vld [vmem:[%s2 + $0x2] sm:$0x1]
    %s57 = sld [smem:[#allocation2 + $0x2]]
    %v58 = vstv %s57
    %v59 = vmul.f32 %v56, %v58
    %v60 = vadd.f32 %v51, %v59
    %s61 = sld [smem:[#allocation2 + $0x82]]
    %v62 = vstv %s61
    %v63 = vmul.f32 %v56, %v62
    %v64 = vadd.f32 %v55, %v63
    %v65 = vld [vmem:[%s2 + $0x3] sm:$0x1]
    %s66 = sld [smem:[#allocation2 + $0x3]]
    %v67 = vstv %s66
    %v68 = vmul.f32 %v65, %v67
    %v69 = vadd.f32 %v60, %v68
    %s70 = sld [smem:[#allocation2 + $0x83]]
    %v71 = vstv %s70
    %v72 = vmul.f32 %v65, %v71
    %v73 = vadd.f32 %v64, %v72
    %v74 = vld [vmem:[%s2 + $0x4] sm:$0x1]
    %s75 = sld [smem:[#allocation2 + $0x4]]
    %v76 = vstv %s75
    %v77 = vmul.f32 %v74, %v76
    %v78 = vadd.f32 %v69, %v77
    %s79 = sld [smem:[#allocation2 + $0x84]]
    %v80 = vstv %s79
    %v81 = vmul.f32 %v74, %v80
    %v82 = vadd.f32 %v73, %v81
    %s83 = sld [smem:[#allocation5]]
    %v84 = vstv %s83
    %v85 = vadd.f32 %v78, %v84
    %vm86 = vcmask 57344
    %87 = vst.msk [vmem:[#allocation7] sm:$0x1] %vm86, %v85
    %s88 = sld [smem:[#allocation5 + $0x1]]
    %v89 = vstv %s88
    %v90 = vadd.f32 %v82, %v89
    %91 = vst.msk [vmem:[#allocation7 + $0x1] sm:$0x1] %vm86, %v90
    // Predicated region
    $region22: #{linear_forward.1} parent=1 // pred_check
      _
    $region23: #{linear_forward.1} parent=1 // pred_check_branch
      %93 = sbr.rel (0) target = $region25
    $region24: #{linear_forward.1} parent=1 // pred_region
      %95 = vsyncadd [#allocation3], 0
      %s97 = sshll.u32 [#allocation7], 4
      %s98 = int_to_ptr.vmem [resolvable:$true] %s97
      %s99 = sshll.u32 %s3, 4
      %s100 = int_to_ptr.hbm [resolvable:$true] %s99
      %102 = dma.vmem_to_hbm [thread:$0]  %s98, 32, %s100, [#allocation3]
    $region25: #{linear_forward.1} parent=1 // pred_fallthru
      _
    // Predicated region
    $region26: #{linear_forward.1} parent=1 // pred_check
      _
    $region27: #{linear_forward.1} parent=1 // pred_check_branch
      %104 = sbr.rel (0) target = $region29
    $region28: #{linear_forward.1} parent=1 // pred_region
      %106 = dma.done [#allocation3], 32
    $region29: #{linear_forward.1} parent=1 // pred_fallthru
      _
    %107 = vsyncpa [#allocation3], 1
    %108 = vsyncpa [#allocation4], 1
    %109 = vsyncpa [#allocation6], 1

</llo_original>
